<compile_context>
chip_gen: v6e
topology: v6e:2x2x1
jax: 0.10.0
libtpu: 0.0.40
codegen_flags: <defaults>
</compile_context>

<pallas_src>
import functools

import jax
import jax.numpy as jnp
from jax.experimental import pallas as pl
from jax.experimental.pallas import tpu as pltpu


_LANE = 128
_SUBLANE = 8


def _round_up(a, b):
    return (a + b - 1) // b * b


# ---------------------------------------------------------------------------
# Generation-aware VMEM sizing (v5e/v6e: 128 MiB, v7x: 64 MiB per TC).
# ---------------------------------------------------------------------------
@functools.lru_cache(maxsize=None)
def _vmem_budget_and_limit():
    cap = None
    try:
        cap = getattr(pltpu.get_tpu_info(), "vmem_capacity_bytes", None)
    except Exception:
        cap = None
    if not cap:
        cap = 64 * 1024 * 1024            # conservative default (v7x per-TC)
    budget = int(cap * 0.70)              # pipeline buffers + resident weights
    limit = int(cap * 0.85)               # scoped-VMEM limit handed to Mosaic
    return budget, limit


# ---------------------------------------------------------------------------
# One-time feature probe: does this jax build accept pipeline_mode=Buffered(1)
# on top-level pallas_call BlockSpecs?  Only used for resident constants whose
# index_map never changes, so single-buffering is semantically safe.
# ---------------------------------------------------------------------------
@functools.lru_cache(maxsize=None)
def _single_buffer_supported():
    try:
        def _probe_kernel(x_ref, o_ref):
            o_ref[...] = x_ref[...] + 1.0

        spec = pl.BlockSpec((_SUBLANE, _LANE), lambda i: (0, 0),
                            pipeline_mode=pl.Buffered(1))
        out = pl.pallas_call(
            _probe_kernel,
            out_shape=jax.ShapeDtypeStruct((_SUBLANE, _LANE), jnp.float32),
            grid=(1,),
            in_specs=[spec],
            out_specs=pl.BlockSpec((_SUBLANE, _LANE), lambda i: (0, 0)),
        )(jnp.zeros((_SUBLANE, _LANE), jnp.float32))
        jax.block_until_ready(out)
        return True
    except Exception:
        return False


# ---------------------------------------------------------------------------
# Kernel body: (tile, Kp) x (Kp, Dp) MXU GEMM + bias + fused f32 LayerNorm.
# ---------------------------------------------------------------------------
def _cube_embed_kernel(x_ref, w_ref, b_ref, g_ref, beta_ref, o_ref, *,
                       eps, d_real):
    # x_ref: (tile, Kp), w_ref: (Kp, Dp) in matmul dtype (bf16/f32).
    # b/g/beta_ref: (1, Dp) f32.  Accumulation and LayerNorm stay in f32.
    y = jnp.dot(x_ref[...], w_ref[...], preferred_element_type=jnp.float32)
    y = y + b_ref[...]
    d_pad = y.shape[-1]
    inv_d = jnp.float32(1.0 / d_real)
    # Padded columns of W / bias are exactly zero, so they do not perturb the
    # sums; normalize by the real embed dim (biased variance, like PyTorch).
    mean = jnp.sum(y, axis=-1, keepdims=True) * inv_d
    centered = y - mean
    if d_pad != d_real:
        lane = jax.lax.broadcasted_iota(jnp.int32, (1, d_pad), 1)
        centered = jnp.where(lane < d_real, centered, 0.0)
    var = jnp.sum(centered * centered, axis=-1, keepdims=True) * inv_d
    inv = jax.lax.rsqrt(var + eps)          # EUP slot; hides under the matmul
    o_ref[...] = (centered * inv * g_ref[...] + beta_ref[...]).astype(o_ref.dtype)


def _pick_tile_m(requested, m, k_pad, d_pad, in_bytes, out_bytes, w_bufs,
                 budget, row_align):
    """Largest row tile <= requested whose VMEM buffers fit the budget."""
    tile = _round_up(min(requested, _round_up(m, row_align)), row_align)
    const_bytes = w_bufs * (k_pad * d_pad * in_bytes + 3 * d_pad * 4)
    while tile > row_align:
        need = (2 * tile * k_pad * in_bytes        # double-buffered x tiles
                + 2 * tile * d_pad * out_bytes     # double-buffered out tiles
                + 3 * tile * d_pad * 4             # f32 acc + LayerNorm temps
                + const_bytes)                     # resident W / LN params
        if need <= budget:
            break
        tile = max(row_align, _round_up(tile // 2, row_align))
    # v7x has 2 TensorCores: keep the parallel grid at >= 2 steps.
    if pl.cdiv(m, tile) < 2:
        half = _round_up(pl.cdiv(m, 2), row_align)
        if half < tile:
            tile = half
    return tile


@functools.partial(
    jax.jit,
    static_argnames=("patch_size", "eps", "tile_m", "matmul_dtype",
                     "out_dtype", "channels_last", "single_buffer"))
def _cube_embedding_impl(x, conv_w, conv_b, ln_g, ln_b, *, patch_size, eps,
                         tile_m, matmul_dtype, out_dtype, channels_last,
                         single_buffer):
    B, C, T, Lat, Lon = x.shape
    pT, pLat, pLon = patch_size
    Tp, Latp, Lonp = T // pT, Lat // pLat, Lon // pLon
    D = conv_w.shape[0]
    K = C * pT * pLat * pLon
    M = B * Tp * Latp * Lonp
    Dp = _round_up(D, _LANE)         # lane-dense (unmasked) output stores
    Kp = _round_up(K, _LANE)         # full-width MXU contraction steps

    in_bytes = jnp.dtype(matmul_dtype).itemsize
    out_bytes = jnp.dtype(out_dtype).itemsize
    row_align = 16 if in_bytes < 4 else _SUBLANE   # bf16 sublane packing
    budget, vmem_limit = _vmem_budget_and_limit()
    w_bufs = 1 if single_buffer else 2
    tile = _pick_tile_m(tile_m, M, Kp, Dp, in_bytes, out_bytes, w_bufs,
                        budget, row_align)
    grid = (pl.cdiv(M, tile),)       # ragged last tile; no row padding pass

    # --- patch matrix: transpose + flatten + cast (+ lane-pad of K when K is
    # not a 128 multiple), all inside this jit so XLA fuses them into a single
    # HBM pass feeding the kernel.  (Higher-effort follow-up: fold the
    # patchify into the kernel's BlockSpecs to halve activation traffic.) ----
    xp = x.reshape(B, C, Tp, pT, Latp, pLat, Lonp, pLon)
    xp = xp.transpose(0, 2, 4, 6, 1, 3, 5, 7)  # (B,T',Lat',Lon',C,pT,pLat,pLon)
    xm = xp.reshape(M, K).astype(matmul_dtype)
    if Kp != K:
        xm = jnp.pad(xm, ((0, 0), (0, Kp - K)))

    # conv weight (D, C, pT, pLat, pLon) -> (Kp, Dp); bias / LN params -> (1, Dp)
    wm = conv_w.reshape(D, K).T.astype(matmul_dtype)
    bm = conv_b.astype(jnp.float32).reshape(1, D)
    gm = ln_g.astype(jnp.float32).reshape(1, D)
    btm = ln_b.astype(jnp.float32).reshape(1, D)
    if Kp != K:
        wm = jnp.pad(wm, ((0, Kp - K), (0, 0)))
    if Dp != D:
        wm = jnp.pad(wm, ((0, 0), (0, Dp - D)))
        bm, gm, btm = (jnp.pad(a, ((0, 0), (0, Dp - D)))
                       for a in (bm, gm, btm))

    def _const_spec(shape):
        index_map = lambda i: (0,) * len(shape)
        if single_buffer:
            # Constant index_map => block never changes; single buffering
            # halves the resident-constant VMEM footprint (matters on v7x).
            return pl.BlockSpec(shape, index_map, pipeline_mode=pl.Buffered(1))
        return pl.BlockSpec(shape, index_map)

    kernel = functools.partial(_cube_embed_kernel, eps=eps, d_real=D)
    out = pl.pallas_call(
        kernel,
        out_shape=jax.ShapeDtypeStruct((M, Dp), out_dtype),
        grid_spec=pltpu.PrefetchScalarGridSpec(
            num_scalar_prefetch=0,
            grid=grid,
            in_specs=[
                pl.BlockSpec((tile, Kp), lambda i: (i, 0)),   # patch rows
                _const_spec((Kp, Dp)),                        # weight (resident)
                _const_spec((1, Dp)),                         # conv bias
                _const_spec((1, Dp)),                         # ln gamma
                _const_spec((1, Dp)),                         # ln beta
            ],
            out_specs=pl.BlockSpec((tile, Dp), lambda i: (i, 0)),
        ),
        compiler_params=pltpu.CompilerParams(
            dimension_semantics=("parallel",),    # megacore-shard the M axis
            vmem_limit_bytes=vmem_limit),
    )(xm, wm, bm, gm, btm)

    # --- back to the module's layout; slice off the D padding (fused). ------
    out = out[:, :D].reshape(B, Tp, Latp, Lonp, D)
    if channels_last:
        return out                                # (B, T', Lat', Lon', D)
    return out.transpose(0, 4, 1, 2, 3)           # (B, D, T', Lat', Lon')


def cube_embedding_forward(x, conv_w, conv_b, ln_g, ln_b, patch_size, *,
                           eps=1e-5, tile_m=1024, matmul_dtype=jnp.bfloat16,
                           out_dtype=None, channels_last=False):
    """CubeEmbedding forward.  x: (B, C, T, Lat, Lon).

    Returns (B, D, T', Lat', Lon') (or (B, T', Lat', Lon', D) if
    channels_last) in `out_dtype`, which defaults to bf16 when the matmul
    runs in bf16 and to x.dtype otherwise.
    """
    matmul_dtype = jnp.dtype(matmul_dtype)
    if out_dtype is None:
        out_dtype = jnp.bfloat16 if matmul_dtype == jnp.bfloat16 else x.dtype
    out_dtype = jnp.dtype(out_dtype)
    return _cube_embedding_impl(
        x, conv_w, conv_b, ln_g, ln_b,
        patch_size=tuple(patch_size), eps=float(eps), tile_m=int(tile_m),
        matmul_dtype=matmul_dtype, out_dtype=out_dtype,
        channels_last=bool(channels_last),
        single_buffer=_single_buffer_supported())


def _reference(x, conv_w, conv_b, ln_g, ln_b, patch_size, eps=1e-5):
    """Pure-JAX reference mirroring the PyTorch forward (f32)."""
    B, C, T, Lat, Lon = x.shape
    pT, pLat, pLon = patch_size
    Tp, Latp, Lonp = T // pT, Lat // pLat, Lon // pLon
    D = conv_w.shape[0]
    K = C * pT * pLat * pLon
    xp = x.reshape(B, C, Tp, pT, Latp, pLat, Lonp, pLon)
    xp = xp.transpose(0, 2, 4, 6, 1, 3, 5, 7).reshape(B * Tp * Latp * Lonp, K)
    y = xp @ conv_w.reshape(D, K).T + conv_b
    mean = y.mean(-1, keepdims=True)
    var = ((y - mean) ** 2).mean(-1, keepdims=True)
    y = (y - mean) / jnp.sqrt(var + eps) * ln_g + ln_b
    return y.reshape(B, Tp, Latp, Lonp, D).transpose(0, 4, 1, 2, 3)


if __name__ == "__main__":
    # Small shapes consistent with the module's forward.
    B, C = 2, 4
    img_size = (4, 16, 16)        # T, Lat, Lon
    patch_size = (2, 4, 4)
    embed_dim = 32

    key = jax.random.PRNGKey(0)
    kx, kw, kb, kg, kbe = jax.random.split(key, 5)

    x = jax.random.normal(kx, (B, C) + img_size, dtype=jnp.float32)
    # Conv3d weight: (embed_dim, in_chans, pT, pLat, pLon); bias: (embed_dim,)
    conv_w = (jax.random.normal(kw, (embed_dim, C) + patch_size,
                                dtype=jnp.float32) * 0.02)
    conv_b = jax.random.normal(kb, (embed_dim,), dtype=jnp.float32) * 0.01
    # LayerNorm params
    ln_g = jnp.ones((embed_dim,), jnp.float32) + \
        0.01 * jax.random.normal(kg, (embed_dim,), dtype=jnp.float32)
    ln_b = 0.01 * jax.random.normal(kbe, (embed_dim,), dtype=jnp.float32)

    ref = _reference(x, conv_w, conv_b, ln_g, ln_b, patch_size)

    # Default fast path: bf16 MXU operands + bf16 output, f32 LayerNorm.
    out_bf16 = cube_embedding_forward(x, conv_w, conv_b, ln_g, ln_b, patch_size)
    out_bf16 = jax.block_until_ready(out_bf16)
    assert out_bf16.shape == (B, embed_dim, 2, 4, 4), out_bf16.shape
    assert jnp.allclose(out_bf16.astype(jnp.float32), ref,
                        atol=5e-2, rtol=5e-2), \
        float(jnp.max(jnp.abs(out_bf16.astype(jnp.float32) - ref)))

    # Channels-last mode (skips the final output transpose).
    out_cl = cube_embedding_forward(x, conv_w, conv_b, ln_g, ln_b, patch_size,
                                    channels_last=True)
    out_cl = jax.block_until_ready(out_cl)
    assert out_cl.shape == (B, 2, 4, 4, embed_dim), out_cl.shape
    assert jnp.allclose(out_cl.astype(jnp.float32),
                        jnp.transpose(ref, (0, 2, 3, 4, 1)),
                        atol=5e-2, rtol=5e-2)

    # Full-precision path through the same kernel: tight check vs. reference.
    out_f32 = cube_embedding_forward(x, conv_w, conv_b, ln_g, ln_b, patch_size,
                                     matmul_dtype=jnp.float32)
    out_f32 = jax.block_until_ready(out_f32)
    assert out_f32.dtype == jnp.float32
    assert jnp.allclose(out_f32, ref, atol=1e-4, rtol=1e-4), \
        float(jnp.max(jnp.abs(out_f32 - ref)))

    print("KERNEL_OK")
</pallas_src>

<mosaic_0001>
module attributes {stable_mosaic.version = 11 : i64} {
  func.func @_probe_kernel(%arg0: i32, %arg1: memref<8x128xf32, #tpu.memory_space<vmem>>, %arg2: memref<8x128xf32, #tpu.memory_space<vmem>>) attributes {dimension_semantics = [#tpu.dimension_semantics<arbitrary>], iteration_bounds = array<i64: 1>, scalar_prefetch = 0 : i64, scratch_operands = 0 : i64, tpu.core_type = #tpu.core_type<tc>, window_params = [{pipeline_mode = #tpu.pipeline_mode<synchronous>, transform_indices = @transform_0, window_bounds = array<i64: 8, 128>}, {pipeline_mode = #tpu.pipeline_mode<synchronous>, transform_indices = @transform_1, window_bounds = array<i64: 8, 128>}]} {
    %c0 = arith.constant 0 : index
    %c0_0 = arith.constant 0 : index
    %0 = vector.load %arg1[%c0, %c0_0] : memref<8x128xf32, #tpu.memory_space<vmem>>, vector<8x128xf32>
    %cst = arith.constant 1.000000e+00 : f32
    %1 = vector.broadcast %cst : f32 to vector<8x128xf32>
    %2 = arith.addf %0, %1 : vector<8x128xf32>
    %c0_1 = arith.constant 0 : index
    %c0_2 = arith.constant 0 : index
    %3 = vector.load %arg2[%c0_1, %c0_2] : memref<8x128xf32, #tpu.memory_space<vmem>>, vector<8x128xf32>
    tpu.vector_store %arg2[%c0_1, %c0_2], %2 {strides = array<i32>} : memref<8x128xf32, #tpu.memory_space<vmem>>, vector<8x128xf32>,
    return
  }
  func.func @transform_0(%arg0: i32) -> (i32, i32) {
    %c0_i32 = arith.constant 0 : i32
    %c0_i32_0 = arith.constant 0 : i32
    %c0_i32_1 = arith.constant 0 : i32
    return %c0_i32, %c0_i32_0 : i32, i32
  }
  func.func @transform_1(%arg0: i32) -> (i32, i32) {
    %c0_i32 = arith.constant 0 : i32
    %c0_i32_0 = arith.constant 0 : i32
    %c0_i32_1 = arith.constant 0 : i32
    return %c0_i32, %c0_i32_0 : i32, i32
  }
}

module attributes {stable_mosaic.version = 11 : i64} {
  func.func @_cube_embed_kernel(%arg0: i32, %arg1: memref<32x128xbf16, #tpu.memory_space<vmem>>, %arg2: memref<128x128xbf16, #tpu.memory_space<vmem>>, %arg3: memref<1x128xf32, #tpu.memory_space<vmem>>, %arg4: memref<1x128xf32, #tpu.memory_space<vmem>>, %arg5: memref<1x128xf32, #tpu.memory_space<vmem>>, %arg6: memref<32x128xbf16, #tpu.memory_space<vmem>>) attributes {dimension_semantics = [#tpu.dimension_semantics<parallel>], iteration_bounds = array<i64: 2>, scalar_prefetch = 0 : i64, scratch_operands = 0 : i64, tpu.core_type = #tpu.core_type<tc>, window_params = [{transform_indices = @transform_0, window_bounds = array<i64: 32, 128>}, {pipeline_mode = #tpu.pipeline_mode<synchronous>, transform_indices = @transform_1, window_bounds = array<i64: 128, 128>}, {pipeline_mode = #tpu.pipeline_mode<synchronous>, transform_indices = @transform_2, window_bounds = array<i64: 1, 128>}, {pipeline_mode = #tpu.pipeline_mode<synchronous>, transform_indices = @transform_3, window_bounds = array<i64: 1, 128>}, {pipeline_mode = #tpu.pipeline_mode<synchronous>, transform_indices = @transform_4, window_bounds = array<i64: 1, 128>}, {transform_indices = @transform_5, window_bounds = array<i64: 32, 128>}]} {
    %c0 = arith.constant 0 : index
    %c0_0 = arith.constant 0 : index
    %0 = vector.load %arg1[%c0, %c0_0] : memref<32x128xbf16, #tpu.memory_space<vmem>>, vector<32x128xbf16>
    %c0_1 = arith.constant 0 : index
    %c0_2 = arith.constant 0 : index
    %1 = vector.load %arg2[%c0_1, %c0_2] : memref<128x128xbf16, #tpu.memory_space<vmem>>, vector<128x128xbf16>
    %cst = arith.constant dense<0.000000e+00> : vector<32x128xf32>
    %2 = tpu.matmul %0, %1, %cst {dimension_numbers = #tpu.dot_dimension_numbers<[1], [0], [0], [1], [0, 0, 1, 1], [], []>} : vector<32x128xbf16>, vector<128x128xbf16>, vector<32x128xf32> -> vector<32x128xf32>
    %c0_3 = arith.constant 0 : index
    %c0_4 = arith.constant 0 : index
    %3 = vector.load %arg3[%c0_3, %c0_4] : memref<1x128xf32, #tpu.memory_space<vmem>>, vector<1x128xf32>
    %4 = vector.broadcast %3 : vector<1x128xf32> to vector<32x128xf32>
    %5 = arith.addf %2, %4 : vector<32x128xf32>
    %cst_5 = arith.constant dense<0.000000e+00> : vector<32xf32>
    %6 = vector.multi_reduction <add>, %5, %cst_5 [1] : vector<32x128xf32> to vector<32xf32>
    %7 = vector.shape_cast %6 : vector<32xf32> to vector<32x1xf32>
    %cst_6 = arith.constant 3.125000e-02 : f32
    %8 = vector.broadcast %cst_6 : f32 to vector<32x1xf32>
    %9 = arith.mulf %7, %8 : vector<32x1xf32>
    %10 = vector.broadcast %9 : vector<32x1xf32> to vector<32x128xf32>
    %11 = arith.subf %5, %10 : vector<32x128xf32>
    %12 = tpu.iota {dimensions = array<i32: 1>} : vector<1x128xi32>
    %c32_i32 = arith.constant 32 : i32
    %13 = vector.broadcast %c32_i32 : i32 to vector<1x128xi32>
    %14 = arith.cmpi slt, %12, %13 : vector<1x128xi32>
    %cst_7 = arith.constant 0.000000e+00 : f32
    %15 = vector.shape_cast %14 : vector<1x128xi1> to vector<1x128xi1>
    %16 = vector.broadcast %15 : vector<1x128xi1> to vector<32x128xi1>
    %17 = vector.broadcast %cst_7 : f32 to vector<32x128xf32>
    %18 = arith.select %16, %11, %17 : vector<32x128xi1>, vector<32x128xf32>
    %19 = arith.mulf %18, %18 : vector<32x128xf32>
    %cst_8 = arith.constant dense<0.000000e+00> : vector<32xf32>
    %20 = vector.multi_reduction <add>, %19, %cst_8 [1] : vector<32x128xf32> to vector<32xf32>
    %21 = vector.shape_cast %20 : vector<32xf32> to vector<32x1xf32>
    %cst_9 = arith.constant 3.125000e-02 : f32
    %22 = vector.broadcast %cst_9 : f32 to vector<32x1xf32>
    %23 = arith.mulf %21, %22 : vector<32x1xf32>
    %cst_10 = arith.constant 9.99999974E-6 : f32
    %24 = vector.broadcast %cst_10 : f32 to vector<32x1xf32>
    %25 = arith.addf %23, %24 : vector<32x1xf32>
    %26 = math.rsqrt %25 : vector<32x1xf32>
    %27 = vector.broadcast %26 : vector<32x1xf32> to vector<32x128xf32>
    %28 = arith.mulf %18, %27 : vector<32x128xf32>
    %c0_11 = arith.constant 0 : index
    %c0_12 = arith.constant 0 : index
    %29 = vector.load %arg4[%c0_11, %c0_12] : memref<1x128xf32, #tpu.memory_space<vmem>>, vector<1x128xf32>
    %30 = vector.broadcast %29 : vector<1x128xf32> to vector<32x128xf32>
    %31 = arith.mulf %28, %30 : vector<32x128xf32>
    %c0_13 = arith.constant 0 : index
    %c0_14 = arith.constant 0 : index
    %32 = vector.load %arg5[%c0_13, %c0_14] : memref<1x128xf32, #tpu.memory_space<vmem>>, vector<1x128xf32>
    %33 = vector.broadcast %32 : vector<1x128xf32> to vector<32x128xf32>
    %34 = arith.addf %31, %33 : vector<32x128xf32>
    %35 = arith.truncf %34 : vector<32x128xf32> to vector<32x128xbf16>
    %c0_15 = arith.constant 0 : index
    %c0_16 = arith.constant 0 : index
    %36 = vector.load %arg6[%c0_15, %c0_16] : memref<32x128xbf16, #tpu.memory_space<vmem>>, vector<32x128xbf16>
    tpu.vector_store %arg6[%c0_15, %c0_16], %35 {strides = array<i32>} : memref<32x128xbf16, #tpu.memory_space<vmem>>, vector<32x128xbf16>,
    return
  }
  func.func @transform_0(%arg0: i32) -> (i32, i32) {
    %c0_i32 = arith.constant 0 : i32
    %c0_i32_0 = arith.constant 0 : i32
    return %arg0, %c0_i32 : i32, i32
  }
  func.func @transform_1(%arg0: i32) -> (i32, i32) {
    %c0_i32 = arith.constant 0 : i32
    %c0_i32_0 = arith.constant 0 : i32
    %c0_i32_1 = arith.constant 0 : i32
    return %c0_i32, %c0_i32_0 : i32, i32
  }
  func.func @transform_2(%arg0: i32) -> (i32, i32) {
    %c0_i32 = arith.constant 0 : i32
    %c0_i32_0 = arith.constant 0 : i32
    %c0_i32_1 = arith.constant 0 : i32
    return %c0_i32, %c0_i32_0 : i32, i32
  }
  func.func @transform_3(%arg0: i32) -> (i32, i32) {
    %c0_i32 = arith.constant 0 : i32
    %c0_i32_0 = arith.constant 0 : i32
    %c0_i32_1 = arith.constant 0 : i32
    return %c0_i32, %c0_i32_0 : i32, i32
  }
  func.func @transform_4(%arg0: i32) -> (i32, i32) {
    %c0_i32 = arith.constant 0 : i32
    %c0_i32_0 = arith.constant 0 : i32
    %c0_i32_1 = arith.constant 0 : i32
    return %c0_i32, %c0_i32_0 : i32, i32
  }
  func.func @transform_5(%arg0: i32) -> (i32, i32) {
    %c0_i32 = arith.constant 0 : i32
    %c0_i32_0 = arith.constant 0 : i32
    return %arg0, %c0_i32 : i32, i32
  }
}

</mosaic_0001>

<llo_original>
// kernel: tpu_custom_call.1
$region0: #{tpu_custom_call.1}
  #allocation0 [shape = 'u32[]', space=smem, size = 0x4, offset = 0x4, fixed_abs, tag = 'smem constant byte address 0x4 - core index']
  #allocation1 [shape = 'u32[144,128]{1,0:T(1,128)}', space=vmem, size = 0x12000, scoped, tag = 'internal scratch']
  %s0 = inlined_call_operand.hbm [shape: f32[8,128], index: 0, kind: input, shape index: {}]
  %s1 = inlined_call_operand.hbm [shape: f32[8,128], index: 1, kind: output, shape index: {}]
  %s2 = sld [smem:[#allocation0]]
  $region18: #{tpu_custom_call.1} parent=0
    _
  %s4 = ssub.s32 1, %s2
  %s5 = scalar_select 0, %s4, %s2
  $region1: #{tpu_custom_call.1} parent=0
    #allocation2 [shape = 'u8[4096]{0}', space=vmem, size = 0x1000, scoped, tag = 'input window, operand 0, single buffered']
    #allocation3 [shape = 's32[1]{0}', space=sflag, size = 0x4, scoped, tag = 'scoped memory for tpu_custom_call.1']
    #allocation4 [shape = 's32[1]{0}', space=sflag, size = 0x4, scoped, tag = 'scoped memory for tpu_custom_call.1']
    #allocation5 [shape = 'u8[4096]{0}', space=vmem, size = 0x1000, scoped, tag = 'output window, operand 0, single buffered']
    %6 = vsyncpa [#allocation3], 0
    %7 = vsyncpa [#allocation4], 0
    // Predicated region
    $region2: #{tpu_custom_call.1} parent=1 // pred_check
      _
    $region3: #{tpu_custom_call.1} parent=1 // pred_check_branch
      %9 = sbr.rel (0) target = $region5
    $region4: #{tpu_custom_call.1} parent=1 // pred_region
      %s11 = ssub.s32 128, 128
      %12 = vsyncadd [#allocation3], %s11
      %s14 = sshll.u32 [#allocation2], 4
      %s15 = int_to_ptr.vmem [resolvable:$true] %s14
      %17 = dma.hbm_to_vmem [thread:$0]  %s0, 128, %s15, [#allocation3]
    $region5: #{tpu_custom_call.1} parent=1 // pred_fallthru
      _
    // Predicated region
    $region6: #{tpu_custom_call.1} parent=1 // pred_check
      _
    $region7: #{tpu_custom_call.1} parent=1 // pred_check_branch
      %19 = sbr.rel (0) target = $region9
    $region8: #{tpu_custom_call.1} parent=1 // pred_region
      %20 = dma.done [#allocation3], 128
    $region9: #{tpu_custom_call.1} parent=1 // pred_fallthru
      _
    %v21 = vld [vmem:[#allocation2] sm:$0xff]
    %v22 = vadd.f32 %v21, 1.0
    %23 = vst [vmem:[#allocation5] sm:$0xff] %v22
    // Predicated region
    $region10: #{tpu_custom_call.1} parent=1 // pred_check
      _
    $region11: #{tpu_custom_call.1} parent=1 // pred_check_branch
      %25 = sbr.rel (0) target = $region13
    $region12: #{tpu_custom_call.1} parent=1 // pred_region
      %s27 = ssub.s32 128, 128
      %28 = vsyncadd [#allocation4], %s27
      %s30 = sshll.u32 [#allocation5], 4
      %s31 = int_to_ptr.vmem [resolvable:$true] %s30
      %33 = dma.vmem_to_hbm [thread:$0]  %s31, 128, %s1, [#allocation4]
    $region13: #{tpu_custom_call.1} parent=1 // pred_fallthru
      _
    // Predicated region
    $region14: #{tpu_custom_call.1} parent=1 // pred_check
      _
    $region15: #{tpu_custom_call.1} parent=1 // pred_check_branch
      %35 = sbr.rel (0) target = $region17
    $region16: #{tpu_custom_call.1} parent=1 // pred_region
      %36 = dma.done [#allocation4], 128
    $region17: #{tpu_custom_call.1} parent=1 // pred_fallthru
      _
    %37 = vsyncpa [#allocation3], 1
    %38 = vsyncpa [#allocation4], 1

// kernel: _cube_embedding_impl.1
$region0: #{_cube_embedding_impl.1}
  #allocation0 [shape = 'u32[]', space=smem, size = 0x4, offset = 0x4, fixed_abs, tag = 'smem constant byte address 0x4 - core index']
  #allocation1 [shape = 'u32[144,128]{1,0:T(1,128)}', space=vmem, size = 0x12000, scoped, tag = 'internal scratch']
  %s0 = inlined_call_operand.vmem [shape: bf16[64,128], index: 0, kind: input, shape index: {}]
  %s1 = inlined_call_operand.vmem [shape: bf16[128,128], index: 1, kind: input, shape index: {}]
  %s2 = inlined_call_operand.vmem [shape: f32[1,128], index: 2, kind: input, shape index: {}]
  %s3 = inlined_call_operand.vmem [shape: f32[1,128], index: 3, kind: input, shape index: {}]
  %s4 = inlined_call_operand.vmem [shape: f32[1,128], index: 4, kind: input, shape index: {}]
  %s5 = inlined_call_operand.hbm [shape: bf16[64,128], index: 5, kind: output, shape index: {}]
  %s6 = sld [smem:[#allocation0]]
  $region53: #{_cube_embedding_impl.1} parent=0
    _
  %s8 = ssub.s32 1, %s6
  %s9 = scalar_select 0, %s8, %s6
  $region1: #{_cube_embedding_impl.1} parent=0
    #allocation2 [shape = 'u8[16384]{0}', space=vmem, size = 0x4000, scoped, tag = 'output window, operand 0']
    #allocation3 [shape = 's32[2]{0}', space=sflag, size = 0x8, scoped, tag = 'scoped memory for _cube_embedding_impl.1']
    %10 = vsyncpa [#allocation3], 0
    %s11 = scalar_lea.sflag [#allocation3], 1
    %12 = vsyncpa %s11, 0
    loop: start=0, step=1, limit=4
    $region2: #{_cube_embedding_impl.1} parent=1 // loop_pre_header
      _
    $region3: #{_cube_embedding_impl.1} parent=1 // loop_header
      %s14 = sphi 0, %s18
      %p15 = scmp.ge.s32.totalorder %s14, 4
      %s24 = sphi 0, %s26
      %s27 = sphi 0, %s24
      %s28 = sphi 0, %s27
      %s44 = sphi 0, %s28
      %s48 = sphi 0, %s48
      %s50 = sphi 0, %s48
      %s51 = sphi 0, %s50
      %s65 = sphi 0, %s51
      %s69 = sphi 0, %s69
      %s71 = sphi 0, %s69
      %s72 = sphi 0, %s71
      %s86 = sphi 0, %s72
      %s90 = sphi 0, %s90
      %s92 = sphi 0, %s90
      %s93 = sphi 0, %s92
      %s107 = sphi 0, %s93
      %s111 = sphi 0, %s111
      %s113 = sphi 0, %s111
      %s114 = sphi 0, %s113
      %s128 = sphi 0, %s114
      %s134 = sphi 0, %s136
      %s137 = sphi 0, %s134
      %s138 = sphi 0, %s137
      %s154 = sphi 0, %s138
    $region4: #{_cube_embedding_impl.1} parent=1 // loop_header_branch
      %17 = sbr.rel (%p15) target = $region8
    $region5: #{_cube_embedding_impl.1} parent=1 // loop_body
      %s19 = ssub.s32 %s14, 1
      %s20 = ssub.s32 %s14, 2
      %s21 = sadd.s32 %s14, 1
      %s22 = ssub.s32 %s14, %s21
      %p23 = scmp.eq.s32.totalorder %s22, 0
      %s25 = sadd.s32 %s24, 1
      %s26 = scalar_select %p23, %s24, %s25
      %p29 = pneg %p23
      %p30 = scmp.eq.s32.totalorder %s14, 1
      %p31 = por %p29, %p30
      %p32 = scmp.ne.s32.totalorder %s24, %s27
      %p33 = scmp.eq.s32.totalorder %s14, 0
      %p34 = por %p32, %p33
      %p35 = scmp.ne.s32.totalorder %s24, %s27
      %p36 = scmp.eq.s32.totalorder %s19, 1
      %p37 = por %p35, %p36
      %p38 = scmp.ne.s32.totalorder %s27, %s28
      %p39 = scmp.eq.s32.totalorder %s19, 0
      %p40 = por %p38, %p39
      %p41 = scmp.ne.s32.totalorder %s27, %s28
      %p42 = scmp.eq.s32.totalorder %s20, 1
      %p43 = por %p41, %p42
      %p45 = scmp.ne.s32.totalorder %s28, %s44
      %p46 = scmp.eq.s32.totalorder %s20, 0
      %p47 = por %p45, %p46
      %s49 = sadd.s32 %s48, 1
      %p52 = scmp.eq.s32.totalorder %s14, 1
      %p53 = scmp.ne.s32.totalorder %s48, %s50
      %p54 = scmp.eq.s32.totalorder %s14, 0
      %p55 = por %p53, %p54
      %p56 = scmp.ne.s32.totalorder %s48, %s50
      %p57 = scmp.eq.s32.totalorder %s19, 1
      %p58 = por %p56, %p57
      %p59 = scmp.ne.s32.totalorder %s50, %s51
      %p60 = scmp.eq.s32.totalorder %s19, 0
      %p61 = por %p59, %p60
      %p62 = scmp.ne.s32.totalorder %s50, %s51
      %p63 = scmp.eq.s32.totalorder %s20, 1
      %p64 = por %p62, %p63
      %p66 = scmp.ne.s32.totalorder %s51, %s65
      %p67 = scmp.eq.s32.totalorder %s20, 0
      %p68 = por %p66, %p67
      %s70 = sadd.s32 %s69, 1
      %p73 = scmp.eq.s32.totalorder %s14, 1
      %p74 = scmp.ne.s32.totalorder %s69, %s71
      %p75 = scmp.eq.s32.totalorder %s14, 0
      %p76 = por %p74, %p75
      %p77 = scmp.ne.s32.totalorder %s69, %s71
      %p78 = scmp.eq.s32.totalorder %s19, 1
      %p79 = por %p77, %p78
      %p80 = scmp.ne.s32.totalorder %s71, %s72
      %p81 = scmp.eq.s32.totalorder %s19, 0
      %p82 = por %p80, %p81
      %p83 = scmp.ne.s32.totalorder %s71, %s72
      %p84 = scmp.eq.s32.totalorder %s20, 1
      %p85 = por %p83, %p84
      %p87 = scmp.ne.s32.totalorder %s72, %s86
      %p88 = scmp.eq.s32.totalorder %s20, 0
      %p89 = por %p87, %p88
      %s91 = sadd.s32 %s90, 1
      %p94 = scmp.eq.s32.totalorder %s14, 1
      %p95 = scmp.ne.s32.totalorder %s90, %s92
      %p96 = scmp.eq.s32.totalorder %s14, 0
      %p97 = por %p95, %p96
      %p98 = scmp.ne.s32.totalorder %s90, %s92
      %p99 = scmp.eq.s32.totalorder %s19, 1
      %p100 = por %p98, %p99
      %p101 = scmp.ne.s32.totalorder %s92, %s93
      %p102 = scmp.eq.s32.totalorder %s19, 0
      %p103 = por %p101, %p102
      %p104 = scmp.ne.s32.totalorder %s92, %s93
      %p105 = scmp.eq.s32.totalorder %s20, 1
      %p106 = por %p104, %p105
      %p108 = scmp.ne.s32.totalorder %s93, %s107
      %p109 = scmp.eq.s32.totalorder %s20, 0
      %p110 = por %p108, %p109
      %s112 = sadd.s32 %s111, 1
      %p115 = scmp.eq.s32.totalorder %s14, 1
      %p116 = scmp.ne.s32.totalorder %s111, %s113
      %p117 = scmp.eq.s32.totalorder %s14, 0
      %p118 = por %p116, %p117
      %p119 = scmp.ne.s32.totalorder %s111, %s113
      %p120 = scmp.eq.s32.totalorder %s19, 1
      %p121 = por %p119, %p120
      %p122 = scmp.ne.s32.totalorder %s113, %s114
      %p123 = scmp.eq.s32.totalorder %s19, 0
      %p124 = por %p122, %p123
      %p125 = scmp.ne.s32.totalorder %s113, %s114
      %p126 = scmp.eq.s32.totalorder %s20, 1
      %p127 = por %p125, %p126
      %p129 = scmp.ne.s32.totalorder %s114, %s128
      %p130 = scmp.eq.s32.totalorder %s20, 0
      %p131 = por %p129, %p130
      %s132 = ssub.s32 %s14, %s21
      %p133 = scmp.eq.s32.totalorder %s132, 0
      %s135 = sadd.s32 %s134, 1
      %s136 = scalar_select %p133, %s134, %s135
      %p139 = pneg %p133
      %p140 = scmp.eq.s32.totalorder %s14, 1
      %p141 = por %p139, %p140
      %p142 = scmp.ne.s32.totalorder %s134, %s137
      %p143 = scmp.eq.s32.totalorder %s14, 0
      %p144 = por %p142, %p143
      %p145 = scmp.ne.s32.totalorder %s134, %s137
      %p146 = scmp.eq.s32.totalorder %s19, 1
      %p147 = por %p145, %p146
      %p148 = scmp.ne.s32.totalorder %s137, %s138
      %p149 = scmp.eq.s32.totalorder %s19, 0
      %p150 = por %p148, %p149
      %p151 = scmp.ne.s32.totalorder %s137, %s138
      %p152 = scmp.eq.s32.totalorder %s20, 1
      %p153 = por %p151, %p152
      %p155 = scmp.ne.s32.totalorder %s138, %s154
      %p156 = scmp.eq.s32.totalorder %s20, 0
      %p157 = por %p155, %p156
      %p158 = scmp.le.s32.totalorder 1, %s14
      %p159 = scmp.lt.s32.totalorder %s14, 3
      %p160 = pnand %p158, %p159
      %p161 = pneg %p160
      // Predicated region
      $region9: #{_cube_embedding_impl.1} parent=5 // pred_check
        _
      $region10: #{_cube_embedding_impl.1} parent=5 // pred_check_branch
        %163 = sbr.rel (%p160) target = $region12
      $region11: #{_cube_embedding_impl.1} parent=5 // pred_region
        %s164 = ssub.s32 %s14, 1
        // Predicated region
        $region13: #{_cube_embedding_impl.1} parent=11 // pred_check
          %p165 = pneg %p61
        $region14: #{_cube_embedding_impl.1} parent=11 // pred_check_branch
          %167 = sbr.rel (%p165) target = $region16
        $region15: #{_cube_embedding_impl.1} parent=11 // pred_region
          _
        $region16: #{_cube_embedding_impl.1} parent=11 // pred_fallthru
          _
        // Predicated region
        $region17: #{_cube_embedding_impl.1} parent=11 // pred_check
          %p168 = pneg %p82
        $region18: #{_cube_embedding_impl.1} parent=11 // pred_check_branch
          %170 = sbr.rel (%p168) target = $region20
        $region19: #{_cube_embedding_impl.1} parent=11 // pred_region
          _
        $region20: #{_cube_embedding_impl.1} parent=11 // pred_fallthru
          _
        // Predicated region
        $region21: #{_cube_embedding_impl.1} parent=11 // pred_check
          %p171 = pneg %p103
        $region22: #{_cube_embedding_impl.1} parent=11 // pred_check_branch
          %173 = sbr.rel (%p171) target = $region24
        $region23: #{_cube_embedding_impl.1} parent=11 // pred_region
          _
        $region24: #{_cube_embedding_impl.1} parent=11 // pred_fallthru
          _
        // Predicated region
        $region25: #{_cube_embedding_impl.1} parent=11 // pred_check
          %p174 = pneg %p124
        $region26: #{_cube_embedding_impl.1} parent=11 // pred_check_branch
          %176 = sbr.rel (%p174) target = $region28
        $region27: #{_cube_embedding_impl.1} parent=11 // pred_region
          _
        $region28: #{_cube_embedding_impl.1} parent=11 // pred_fallthru
          _
      $region12: #{_cube_embedding_impl.1} parent=5 // pred_fallthru
        _
      %p177 = scmp.lt.s32.totalorder %s14, 2
      // Predicated region
      $region29: #{_cube_embedding_impl.1} parent=5 // pred_check
        %p178 = pneg %p177
      $region30: #{_cube_embedding_impl.1} parent=5 // pred_check_branch
        %180 = sbr.rel (%p178) target = $region32
      $region31: #{_cube_embedding_impl.1} parent=5 // pred_region
        // Predicated region
        $region33: #{_cube_embedding_impl.1} parent=31 // pred_check
          %p181 = pneg %p34
        $region34: #{_cube_embedding_impl.1} parent=31 // pred_check_branch
          %183 = sbr.rel (%p181) target = $region36
        $region35: #{_cube_embedding_impl.1} parent=31 // pred_region
          %s184 = smul.u32 4, %s14
          %p185 = scmp.lt.s32.totalorder %s184, 7
          %s186 = scalar_select %p185, %s184, 7
          %s187 = smul.addr %s186, 4
          %s188 = scalar_lea.vmem %s0, %s187
          %s189 = smul.u32 4, %s14
        $region36: #{_cube_embedding_impl.1} parent=31 // pred_fallthru
          _
      $region32: #{_cube_embedding_impl.1} parent=5 // pred_fallthru
        _
      %p190 = scmp.le.s32.totalorder 1, %s14
      %p191 = scmp.lt.s32.totalorder %s14, 3
      %p192 = pnand %p190, %p191
      %p193 = pneg %p192
      // Predicated region
      $region37: #{_cube_embedding_impl.1} parent=5 // pred_check
        _
      $region38: #{_cube_embedding_impl.1} parent=5 // pred_check_branch
        %195 = sbr.rel (%p192) target = $region40
      $region39: #{_cube_embedding_impl.1} parent=5 // pred_region
        %s196 = ssub.s32 %s14, 1
        %s197 = smul.u32 4, %s19
        %p198 = scmp.lt.s32.totalorder %s197, 7
        %s199 = scalar_select %p198, %s197, 7
        %s200 = smul.addr %s199, 4
        %s201 = scalar_lea.vmem %s0, %s200
        %p202 = pneg %p40
        %p203 = pneg %p37
        %p204 = pneg %p61
        %p205 = pneg %p58
        %p206 = pneg %p82
        %p207 = pneg %p79
        %p208 = pneg %p103
        %p209 = pneg %p100
        %p210 = pneg %p124
        %p211 = pneg %p121
        %p212 = pneg %p150
        %p213 = pneg %p147
        %s214 = sand.u32 %s137, 1
        %s215 = scalar_lea.sflag [#allocation3], %s214
        %s216 = sand.u32 %s137, 1
        %s217 = smul.addr %s216, 16
        %s218 = scalar_lea.vmem [#allocation2], %s217
        %s219 = smul.u32 4, %s19
        %p220 = scmp.lt.s32.totalorder %s219, 7
        %s221 = scalar_select %p220, %s219, 7
        %s222 = smul.addr %s221, 4
        %s223 = scalar_lea.vmem %s0, %s222
        %s224 = smul.u32 4, %s19
        %s225 = smul.u32 4, %s19
        %v227 = vld [vmem:[%s223] sm:$0xf]
        %v228 = vld [vmem:[%s223 + $0x4] sm:$0xf]
        %v229 = vld [vmem:[%s223 + $0x8] sm:$0xf]
        %v230 = vld [vmem:[%s223 + $0xc] sm:$0xf]
        %v231 = vld [vmem:[%s1] sm:$0xf]
        %v232 = vld [vmem:[%s1 + $0x4] sm:$0xf]
        %v233 = vld [vmem:[%s1 + $0x8] sm:$0xf]
        %v234 = vld [vmem:[%s1 + $0xc] sm:$0xf]
        %v235 = vld [vmem:[%s1 + $0x10] sm:$0xf]
        %v236 = vld [vmem:[%s1 + $0x14] sm:$0xf]
        %v237 = vld [vmem:[%s1 + $0x18] sm:$0xf]
        %v238 = vld [vmem:[%s1 + $0x1c] sm:$0xf]
        %v239 = vld [vmem:[%s1 + $0x20] sm:$0xf]
        %v240 = vld [vmem:[%s1 + $0x24] sm:$0xf]
        %v241 = vld [vmem:[%s1 + $0x28] sm:$0xf]
        %v242 = vld [vmem:[%s1 + $0x2c] sm:$0xf]
        %v243 = vld [vmem:[%s1 + $0x30] sm:$0xf]
        %v244 = vld [vmem:[%s1 + $0x34] sm:$0xf]
        %v245 = vld [vmem:[%s1 + $0x38] sm:$0xf]
        %v246 = vld [vmem:[%s1 + $0x3c] sm:$0xf]
        %v247 = vld [vmem:[%s2] sm:$0x1]
        %v249 = vlaneseq
        %v250 = vshrl.u32 %v249, 7
        %v251 = vsub.s32 0, %v250
        %v252 = vrot.slane %v247, %v251
        %v258 = vunpack.c.l.b16 %v227
        %v259 = vunpack.c.l.b16 %v228
        %v260 = vunpack.c.l.b16 %v229
        %v261 = vunpack.c.l.b16 %v230
        %v262 = vpack.c.b16 %v259, %v258
        %v263 = vpack.c.b16 %v261, %v260
        %v282 = vunpack.c.l.b16 %v231
        %v283 = vunpack.c.l.b16 %v232
        %v284 = vunpack.c.l.b16 %v233
        %v285 = vunpack.c.l.b16 %v234
        %v286 = vunpack.c.l.b16 %v235
        %v287 = vunpack.c.l.b16 %v236
        %v288 = vunpack.c.l.b16 %v237
        %v289 = vunpack.c.l.b16 %v238
        %v290 = vunpack.c.l.b16 %v239
        %v291 = vunpack.c.l.b16 %v240
        %v292 = vunpack.c.l.b16 %v241
        %v293 = vunpack.c.l.b16 %v242
        %v294 = vunpack.c.l.b16 %v243
        %v295 = vunpack.c.l.b16 %v244
        %v296 = vunpack.c.l.b16 %v245
        %v297 = vunpack.c.l.b16 %v246
        %v298 = vpack.c.b16 %v283, %v282
        %v299 = vpack.c.b16 %v285, %v284
        %v300 = vpack.c.b16 %v287, %v286
        %v301 = vpack.c.b16 %v289, %v288
        %v302 = vpack.c.b16 %v291, %v290
        %v303 = vpack.c.b16 %v293, %v292
        %v304 = vpack.c.b16 %v295, %v294
        %v305 = vpack.c.b16 %v297, %v296
        %314 = vmatprep.subr.bf16.mxu0 0
        %315 = vmatpush1.bf16.msra.mxu0 %v305
        %316 = vmatprep.subr.bf16.mxu0 0
        %317 = vmatpush1.bf16.msra.mxu0 %v304
        %318 = vmatprep.subr.bf16.mxu0 0
        %319 = vmatpush1.bf16.msra.mxu0 %v303
        %320 = vmatprep.subr.bf16.mxu0 0
        %321 = vmatpush1.bf16.msra.mxu0 %v302
        %322 = vmatprep.subr.bf16.mxu0 0
        %323 = vmatpush1.bf16.msra.mxu0 %v301
        %324 = vmatprep.subr.bf16.mxu0 0
        %325 = vmatpush1.bf16.msra.mxu0 %v300
        %326 = vmatprep.subr.bf16.mxu0 0
        %327 = vmatpush1.bf16.msra.mxu0 %v299
        %328 = vmatprep.subr.bf16.mxu0 0
        %329 = vmatpush1.bf16.msra.mxu0 %v298
        %330 = vmatprep.subr.bf16.mxu0 0
        %331 = vmatpush2.bf16.msra.mxu0 0
        %332 = vmatprep.subr.bf16.mxu0 0
        %333 = vmatpush2.bf16.msra.mxu0 0
        %334 = vmatprep.subr.bf16.mxu0 0
        %335 = vmatpush2.bf16.msra.mxu0 0
        %336 = vmatprep.subr.bf16.mxu0 0
        %337 = vmatpush2.bf16.msra.mxu0 0
        %338 = vmatprep.subr.bf16.mxu0 0
        %339 = vmatpush2.bf16.msra.mxu0 0
        %340 = vmatprep.subr.bf16.mxu0 0
        %341 = vmatpush2.bf16.msra.mxu0 0
        %342 = vmatprep.subr.bf16.mxu0 0
        %343 = vmatpush2.bf16.msra.mxu0 0
        %344 = vmatprep.subr.bf16.mxu0 0
        %345 = vmatpush2.bf16.msra.mxu0 0
        %346 = vmatprep.mubr.bf16.mxu0 0
        %347 = vmatmul.mubr.bf16.gmra.mxu0 %v262
        %v348 = vpop.f32.mrf.mxu0
        %v349 = vadd.f32 %v252, %v348
        %v350 = vpop.f32.mrf.mxu0
        %v351 = vpop.f32.mrf.mxu0
        %v352 = vadd.f32 %v252, %v351
        %v353 = vpop.f32.mrf.mxu0
        %354 = vmatprep.mubr.bf16.mxu0 0
        %355 = vmatmul.mubr.bf16.gmra.mxu0 %v263
        %v356 = vpop.f32.mrf.mxu0
        %v357 = vadd.f32 %v252, %v356
        %v358 = vpop.f32.mrf.mxu0
        %v359 = vpop.f32.mrf.mxu0
        %v360 = vadd.f32 %v252, %v359
        %v361 = vpop.f32.mrf.mxu0
        %362 = vdwg.mxu0
        %363 = vadd.xlane.f32.xlu0 %v349
        %v364 = vpop.xlane.xlu0 %363
        %365 = vadd.xlane.f32.xlu0 %v352
        %v366 = vpop.xlane.xlu0 %365
        %367 = vadd.xlane.f32.xlu0 %v357
        %v368 = vpop.xlane.xlu0 %367
        %369 = vadd.xlane.f32.xlu0 %v360
        %v370 = vpop.xlane.xlu0 %369
        %v371 = vmul.f32 %v364, 0.03125
        %v372 = vmul.f32 %v366, 0.03125
        %v373 = vmul.f32 %v368, 0.03125
        %v374 = vmul.f32 %v370, 0.03125
        %v375 = vsub.f32 %v349, %v371
        %v376 = vsub.f32 %v352, %v372
        %v377 = vsub.f32 %v357, %v373
        %v378 = vsub.f32 %v360, %v374
        %v379 = vlaneseq
        %v380 = vand.u32 %v379, 127
        %vm381 = vcmp.lt.s32.totalorder %v380, 32
        %v382 = vsel %vm381, 1, 0
        %vm383 = vcmp.eq.s32.totalorder %v382, 1
        %v384 = vsel %vm383, %v375, 0.0
        %v385 = vsel %vm383, %v376, 0.0
        %v386 = vsel %vm383, %v377, 0.0
        %v387 = vsel %vm383, %v378, 0.0
        %v388 = vmul.f32 %v384, %v384
        %v389 = vmul.f32 %v385, %v385
        %v390 = vmul.f32 %v386, %v386
        %v391 = vmul.f32 %v387, %v387
        %392 = vadd.xlane.f32.xlu0 %v388
        %v393 = vpop.xlane.xlu0 %392
        %394 = vadd.xlane.f32.xlu0 %v389
        %v395 = vpop.xlane.xlu0 %394
        %396 = vadd.xlane.f32.xlu0 %v390
        %v397 = vpop.xlane.xlu0 %396
        %398 = vadd.xlane.f32.xlu0 %v391
        %v399 = vpop.xlane.xlu0 %398
        %v400 = vmul.f32 %v393, 0.03125
        %v401 = vmul.f32 %v395, 0.03125
        %v402 = vmul.f32 %v397, 0.03125
        %v403 = vmul.f32 %v399, 0.03125
        %v404 = vadd.f32 %v400, 1e-05
        %v405 = vadd.f32 %v401, 1e-05
        %v406 = vadd.f32 %v402, 1e-05
        %v407 = vadd.f32 %v403, 1e-05
        %v408 = vrsqrt.pop %v404
        %v409 = vrsqrt.pop %v405
        %v410 = vrsqrt.pop %v406
        %v411 = vrsqrt.pop %v407
        %v412 = vmul.f32 %v384, %v408
        %v413 = vmul.f32 %v385, %v409
        %v414 = vmul.f32 %v386, %v410
        %v415 = vmul.f32 %v387, %v411
        %v416 = vld [vmem:[%s3] sm:$0x1]
        %v418 = vlaneseq
        %v419 = vshrl.u32 %v418, 7
        %v420 = vsub.s32 0, %v419
        %v421 = vrot.slane %v416, %v420
        %v423 = vmul.f32 %v412, %v421
        %v424 = vmul.f32 %v413, %v421
        %v425 = vmul.f32 %v414, %v421
        %v426 = vmul.f32 %v415, %v421
        %v427 = vld [vmem:[%s4] sm:$0x1]
        %v429 = vlaneseq
        %v430 = vshrl.u32 %v429, 7
        %v431 = vsub.s32 0, %v430
        %v432 = vrot.slane %v427, %v431
        %v434 = vadd.f32 %v423, %v432
        %v435 = vadd.f32 %v424, %v432
        %v436 = vadd.f32 %v425, %v432
        %v437 = vadd.f32 %v426, %v432
        %v438 = vpack.c.bf16 %v435, %v434
        %v439 = vpack.c.bf16 %v437, %v436
        %v442 = vunpack.c.l.b16 %v438
        %v443 = vunpack.c.h.b16 %v438
        %v444 = vunpack.c.l.b16 %v439
        %v445 = vunpack.c.h.b16 %v439
        %v446 = vpack.c.b16 %v442, %v442
        %v447 = vpack.c.b16 %v443, %v443
        %v448 = vpack.c.b16 %v444, %v444
        %v449 = vpack.c.b16 %v445, %v445
        %454 = vst [vmem:[%s218] sm:$0xf] %v446
        %455 = vst [vmem:[%s218 + $0x4] sm:$0xf] %v447
        %456 = vst [vmem:[%s218 + $0x8] sm:$0xf] %v448
        %457 = vst [vmem:[%s218 + $0xc] sm:$0xf] %v449
        %s458 = sand.u32 %s137, 1
        %s459 = scalar_lea.sflag [#allocation3], %s458
        %s460 = sand.u32 %s137, 1
        %s461 = smul.addr %s460, 16
        %s462 = scalar_lea.vmem [#allocation2], %s461
        // Predicated region
        $region41: #{_cube_embedding_impl.1} parent=39 // pred_check
          %p463 = pneg %p147
        $region42: #{_cube_embedding_impl.1} parent=39 // pred_check_branch
          %465 = sbr.rel (%p463) target = $region44
        $region43: #{_cube_embedding_impl.1} parent=39 // pred_region
          %s466 = smul.u32 4, %s19
          %s468 = ssub.s32 256, 256
          %469 = vsyncadd %s459, %s468
          %s470 = smul.addr %s466, 64
          %s471 = scalar_lea.hbm %s5, %s470
          %s472 = sshll.u32 %s462, 4
          %s473 = int_to_ptr.vmem [resolvable:$true] %s472
          %478 = dma.vmem_to_hbm [thread:$0]  %s473, 256, %s471, %s459, 64, 64, 4
        $region44: #{_cube_embedding_impl.1} parent=39 // pred_fallthru
          _
      $region40: #{_cube_embedding_impl.1} parent=5 // pred_fallthru
        _
      %p479 = scmp.le.s32.totalorder 2, %s14
      // Predicated region
      $region45: #{_cube_embedding_impl.1} parent=5 // pred_check
        %p480 = pneg %p479
      $region46: #{_cube_embedding_impl.1} parent=5 // pred_check_branch
        %482 = sbr.rel (%p480) target = $region48
      $region47: #{_cube_embedding_impl.1} parent=5 // pred_region
        %s483 = ssub.s32 %s14, 2
        // Predicated region
        $region49: #{_cube_embedding_impl.1} parent=47 // pred_check
          %p484 = pneg %p153
        $region50: #{_cube_embedding_impl.1} parent=47 // pred_check_branch
          %486 = sbr.rel (%p484) target = $region52
        $region51: #{_cube_embedding_impl.1} parent=47 // pred_region
          %s487 = sand.u32 %s138, 1
          %s488 = scalar_lea.sflag [#allocation3], %s487
          %s489 = sand.u32 %s138, 1
          %s490 = smul.addr %s489, 16
          %s491 = scalar_lea.vmem [#allocation2], %s490
          %492 = dma.done %s488, 256
        $region52: #{_cube_embedding_impl.1} parent=47 // pred_fallthru
          _
      $region48: #{_cube_embedding_impl.1} parent=5 // pred_fallthru
        _
    $region6: #{_cube_embedding_impl.1} parent=1 // loop_footer
      %s18 = sadd.s32 1, %s14
    $region7: #{_cube_embedding_impl.1} parent=1 // loop_footer_branch
      %13 = sbr.rel target = $region3
    $region8: #{_cube_embedding_impl.1} parent=1 // loop_exit
      _
    %493 = vsyncpa [#allocation3], 1
    %s494 = scalar_lea.sflag [#allocation3], 1
    %495 = vsyncpa %s494, 1

</llo_original>
